<compile_context>
chip_gen: v7x
topology: tpu7x:2x2x1
jax: 0.10.0
libtpu: 0.0.40
codegen_flags: <defaults>
</compile_context>

<pallas_src>
import functools

import jax
import jax.numpy as jnp
from jax.experimental import pallas as pl
from jax.experimental.pallas import tpu as pltpu


def _vmem_capacity_bytes() -> int:
    """Per-core VMEM capacity (falls back to the v7x 64 MiB if unqueryable)."""
    try:
        cap = int(getattr(pltpu.get_tpu_info(), "vmem_capacity_bytes", 0))
        if cap > 0:
            return cap
    except Exception:
        pass
    return 64 << 20


# ----------------------------------------------------------------------------
# Kernel 1: small-V one-hot / MXU gather
# ----------------------------------------------------------------------------
def _onehot_kernel(ids_ref, table_ref, out_ref):
    # ids_ref:   (tile_n, 1) int32  VMEM block
    # table_ref: (V, H)             VMEM (resident across grid steps)
    # out_ref:   (tile_n, H)        VMEM block
    ids = ids_ref[...]
    tn = ids.shape[0]
    v = table_ref.shape[0]
    col = jax.lax.broadcasted_iota(jnp.int32, (tn, v), 1)
    onehot = (col == ids).astype(table_ref.dtype)          # exact 0/1 values
    out_ref[...] = jnp.dot(
        onehot, table_ref[...], preferred_element_type=jnp.float32
    ).astype(out_ref.dtype)


# ----------------------------------------------------------------------------
# Kernel 2: large-V DMA row gather (table stays in HBM)
# ----------------------------------------------------------------------------
def _gather_kernel(ids_ref, table_ref, out_ref, sem, *, tile_n: int, vocab: int):
    # ids_ref:   (n_pad,) int32  SMEM (scalar prefetch)
    # table_ref: (V, Hg)         HBM (pl.ANY)
    # out_ref:   (tile_n, Hg)    VMEM output block
    # sem:       single DMA semaphore
    base = pl.program_id(0) * tile_n

    def _start(r, carry):
        rid = ids_ref[base + r]
        rid = jnp.minimum(jnp.maximum(rid, 0), vocab - 1)   # avoid OOB DMA
        pltpu.make_async_copy(table_ref.at[rid], out_ref.at[r], sem).start()
        return carry

    jax.lax.fori_loop(0, tile_n, _start, 0)

    # One wait per issued copy (same-shaped descriptor => matching decrement).
    def _wait(r, carry):
        pltpu.make_async_copy(table_ref.at[0], out_ref.at[0], sem).wait()
        return carry

    jax.lax.fori_loop(0, tile_n, _wait, 0)


# ----------------------------------------------------------------------------
# Wrapper
# ----------------------------------------------------------------------------
def speaker_embeddings(speaker_ids, table, *, tile_n=None, path=None):
    """Embedding lookup: speaker_ids (B, S) int -> (B, S, H) rows of table (V, H)."""
    B, S = speaker_ids.shape
    V, H = table.shape
    N = B * S
    itemsize = jnp.dtype(table.dtype).itemsize
    table_bytes = V * H * itemsize

    # ---------------- path selection ----------------
    if path is None:
        # One-hot/MXU only while the table is comfortably VMEM-resident and the
        # 2*N*V*H FLOPs / (tile_n, V) one-hot stay cheap; otherwise DMA gather.
        path = "onehot" if (table_bytes <= (4 << 20) and V <= 2048) else "gather"
    assert path in ("onehot", "gather")

    vmem_cap = _vmem_capacity_bytes()
    budget = vmem_cap // 2  # headroom for Mosaic-internal scratch / pipelining

    # ---------------- tile size ----------------
    if tile_n is None:
        if path == "onehot":
            # double-buffered out rows + ids + (iota + one-hot) rows, plus table
            per_row = 2 * (H * itemsize + 4) + V * (4 + itemsize)
            avail = max(8 * per_row, budget - 2 * table_bytes)
        else:
            per_row = 2 * H * itemsize          # double-buffered output block
            avail = budget
        tile_n = int(min(2048, max(8, avail // max(1, per_row))))
    tile_n = int(min(tile_n, N))
    if tile_n < N:
        tile_n = max(8, (tile_n // 8) * 8)      # sublane-aligned unless full
    n_tiles = pl.cdiv(N, tile_n)
    n_pad = n_tiles * tile_n

    # Only the ids are padded; the output keeps its exact (N, H) shape and the
    # partial last block's writeback is masked by Pallas (no pad+slice pass).
    ids_flat = speaker_ids.reshape(N).astype(jnp.int32)
    if n_pad != N:
        ids_flat = jnp.pad(ids_flat, (0, n_pad - N))        # pad rows -> table[0]

    # ======================= DMA gather path =======================
    if path == "gather":
        if itemsize < 4 and (H * itemsize) % 4 == 0:
            # Pack sub-32-bit rows into uint32 so every row DMA is word-aligned.
            pack = 4 // itemsize
            gtable = jax.lax.bitcast_convert_type(
                table.reshape(V, H // pack, pack), jnp.uint32)
        else:
            # TODO(synk): sub-32-bit rows whose byte size is not a multiple of 4
            # fall through to a native (possibly slow) narrow-row DMA.
            pack = 1
            gtable = table
        Vg, Hg = gtable.shape
        gitem = jnp.dtype(gtable.dtype).itemsize

        ws = 2 * tile_n * Hg * gitem
        vmem_limit = int(min(vmem_cap * 3 // 4,
                             max(32 << 20, int(1.5 * ws) + (2 << 20))))
        cost = pl.CostEstimate(
            flops=0,
            transcendentals=0,
            bytes_accessed=N * 4 + min(V, N) * H * itemsize + N * H * itemsize,
        )

        kernel = functools.partial(_gather_kernel, tile_n=tile_n, vocab=Vg)
        out = pl.pallas_call(
            kernel,
            out_shape=jax.ShapeDtypeStruct((N, Hg), gtable.dtype),
            grid_spec=pltpu.PrefetchScalarGridSpec(
                num_scalar_prefetch=1,                         # ids -> SMEM
                grid=(n_tiles,),
                in_specs=[pl.BlockSpec(memory_space=pl.ANY)],  # table stays in HBM
                out_specs=pl.BlockSpec((tile_n, Hg), lambda i, ids: (i, 0)),
                scratch_shapes=[pltpu.SemaphoreType.DMA],
            ),
            compiler_params=pltpu.CompilerParams(
                dimension_semantics=("parallel",),
                vmem_limit_bytes=vmem_limit,
            ),
            cost_estimate=cost,
        )(ids_flat, gtable)

        if pack > 1:
            out = jax.lax.bitcast_convert_type(out, table.dtype).reshape(N, H)
        return out.reshape(B, S, H)

    # ======================= one-hot / MXU path =======================
    ids_col = ids_flat.reshape(n_pad, 1)
    cost = pl.CostEstimate(
        flops=2 * N * V * H,
        transcendentals=0,
        bytes_accessed=N * 4 + table_bytes + N * H * itemsize,
    )

    def _call(single_buffer_table):
        n_table_bufs = 1 if single_buffer_table else 2
        ws = (n_table_bufs * table_bytes
              + 2 * tile_n * (H * itemsize + 4)
              + tile_n * V * (4 + itemsize))
        vmem_limit = int(min(vmem_cap * 3 // 4,
                             max(32 << 20, int(1.5 * ws) + (2 << 20))))
        table_spec_kwargs = (
            dict(pipeline_mode=pl.Buffered(1)) if single_buffer_table else {})
        return pl.pallas_call(
            _onehot_kernel,
            out_shape=jax.ShapeDtypeStruct((N, H), table.dtype),
            grid_spec=pltpu.PrefetchScalarGridSpec(
                num_scalar_prefetch=0,
                grid=(n_tiles,),
                in_specs=[
                    pl.BlockSpec((tile_n, 1), lambda i: (i, 0)),     # per-tile ids
                    pl.BlockSpec((V, H), lambda i: (0, 0),           # resident table
                                 **table_spec_kwargs),
                ],
                out_specs=pl.BlockSpec((tile_n, H), lambda i: (i, 0)),
            ),
            compiler_params=pltpu.CompilerParams(
                dimension_semantics=("parallel",),                   # megacore v7x
                vmem_limit_bytes=vmem_limit,
            ),
            cost_estimate=cost,
        )(ids_col, table)

    try:
        out = _call(single_buffer_table=True)
    except Exception:
        # The running JAX rejected pipeline_mode=pl.Buffered(1) on the table
        # BlockSpec; fall back to the default double-buffered table (correct,
        # just uses more VMEM).
        out = _call(single_buffer_table=False)
    return out.reshape(B, S, H)


if __name__ == "__main__":
    # Small shapes consistent with the module: batch=2, seq=8, vocab=16, hidden=32.
    B, S, V, H = 2, 8, 16, 32

    key = jax.random.PRNGKey(0)
    k_ids, k_tab, k_ids2 = jax.random.split(key, 3)

    speaker_ids = jax.random.randint(k_ids, (B, S), 0, V, dtype=jnp.int32)
    table = jax.random.normal(k_tab, (V, H), dtype=jnp.float32) * 0.02
    ref = jnp.take(table, speaker_ids, axis=0)

    # 1) Default path (small V -> one-hot/MXU, single tile).
    out = jax.block_until_ready(speaker_embeddings(speaker_ids, table))
    assert out.shape == (B, S, H)
    assert jnp.allclose(out, ref, atol=1e-6), "mismatch (default one-hot path)"

    # 2) Forced multi-tile one-hot path (tile_n=8 -> 2 grid steps, resident table).
    out2 = jax.block_until_ready(speaker_embeddings(speaker_ids, table, tile_n=8))
    assert jnp.allclose(out2, ref, atol=1e-6), "mismatch (tiled one-hot path)"

    # 3) DMA-gather path (large-V codepath), forced at this small size.
    out3 = jax.block_until_ready(
        speaker_embeddings(speaker_ids, table, path="gather"))
    assert jnp.allclose(out3, ref, atol=1e-6), "mismatch (gather path)"

    # 4) Non-multiple-of-tile N (3x5 -> N=15): partial last output block, both paths.
    ids_odd = jax.random.randint(k_ids2, (3, 5), 0, V, dtype=jnp.int32)
    ref_odd = jnp.take(table, ids_odd, axis=0)
    out4 = jax.block_until_ready(
        speaker_embeddings(ids_odd, table, tile_n=8, path="onehot"))
    assert jnp.allclose(out4, ref_odd, atol=1e-6), "mismatch (partial, one-hot)"
    out5 = jax.block_until_ready(
        speaker_embeddings(ids_odd, table, tile_n=8, path="gather"))
    assert jnp.allclose(out5, ref_odd, atol=1e-6), "mismatch (partial, gather)"

    # 5) bf16 table on the gather path (uint32-packed rows) is an exact row copy.
    table_bf16 = table.astype(jnp.bfloat16)
    out6 = jax.block_until_ready(
        speaker_embeddings(speaker_ids, table_bf16, path="gather"))
    assert jnp.array_equal(out6, jnp.take(table_bf16, speaker_ids, axis=0)), \
        "mismatch (bf16 gather path)"

    print("KERNEL_OK")
</pallas_src>

<mosaic_0001>
module attributes {stable_mosaic.version = 11 : i64} {
  func.func @_onehot_kernel(%arg0: i32, %arg1: memref<16x1xi32, #tpu.memory_space<vmem>>, %arg2: memref<16x32xf32, #tpu.memory_space<vmem>>, %arg3: memref<16x32xf32, #tpu.memory_space<vmem>>) attributes {dimension_semantics = [#tpu.dimension_semantics<parallel>], iteration_bounds = array<i64: 1>, scalar_prefetch = 0 : i64, scratch_operands = 0 : i64, tpu.core_type = #tpu.core_type<tc>, window_params = [{transform_indices = @transform_0, window_bounds = array<i64: 16, 1>}, {pipeline_mode = #tpu.pipeline_mode<synchronous>, transform_indices = @transform_1, window_bounds = array<i64: 16, 32>}, {transform_indices = @transform_2, window_bounds = array<i64: 16, 32>}]} {
    %c0 = arith.constant 0 : index
    %c0_0 = arith.constant 0 : index
    %0 = vector.load %arg1[%c0, %c0_0] : memref<16x1xi32, #tpu.memory_space<vmem>>, vector<16x1xi32>
    %1 = tpu.iota {dimensions = array<i32: 1>} : vector<16x16xi32>
    %2 = vector.broadcast %0 : vector<16x1xi32> to vector<16x16xi32>
    %3 = arith.cmpi eq, %1, %2 : vector<16x16xi32>
    %4 = arith.extui %3 : vector<16x16xi1> to vector<16x16xi32>
    %5 = arith.sitofp %4 : vector<16x16xi32> to vector<16x16xf32>
    %c0_1 = arith.constant 0 : index
    %c0_2 = arith.constant 0 : index
    %6 = vector.load %arg2[%c0_1, %c0_2] : memref<16x32xf32, #tpu.memory_space<vmem>>, vector<16x32xf32>
    %cst = arith.constant dense<0.000000e+00> : vector<16x32xf32>
    %7 = tpu.matmul %5, %6, %cst {dimension_numbers = #tpu.dot_dimension_numbers<[1], [0], [0], [1], [0, 0, 1, 1], [], []>} : vector<16x16xf32>, vector<16x32xf32>, vector<16x32xf32> -> vector<16x32xf32>
    %c0_3 = arith.constant 0 : index
    %c0_4 = arith.constant 0 : index
    %8 = vector.load %arg3[%c0_3, %c0_4] : memref<16x32xf32, #tpu.memory_space<vmem>>, vector<16x32xf32>
    tpu.vector_store %arg3[%c0_3, %c0_4], %7 {strides = array<i32>} : memref<16x32xf32, #tpu.memory_space<vmem>>, vector<16x32xf32>,
    return
  }
  func.func @transform_0(%arg0: i32) -> (i32, i32) {
    %c0_i32 = arith.constant 0 : i32
    %c0_i32_0 = arith.constant 0 : i32
    return %arg0, %c0_i32 : i32, i32
  }
  func.func @transform_1(%arg0: i32) -> (i32, i32) {
    %c0_i32 = arith.constant 0 : i32
    %c0_i32_0 = arith.constant 0 : i32
    %c0_i32_1 = arith.constant 0 : i32
    return %c0_i32, %c0_i32_0 : i32, i32
  }
  func.func @transform_2(%arg0: i32) -> (i32, i32) {
    %c0_i32 = arith.constant 0 : i32
    %c0_i32_0 = arith.constant 0 : i32
    return %arg0, %c0_i32 : i32, i32
  }
}

module attributes {stable_mosaic.version = 11 : i64} {
  func.func @_onehot_kernel(%arg0: i32, %arg1: memref<16x1xi32, #tpu.memory_space<vmem>>, %arg2: memref<16x32xf32, #tpu.memory_space<vmem>>, %arg3: memref<16x32xf32, #tpu.memory_space<vmem>>) attributes {dimension_semantics = [#tpu.dimension_semantics<parallel>], iteration_bounds = array<i64: 1>, scalar_prefetch = 0 : i64, scratch_operands = 0 : i64, tpu.core_type = #tpu.core_type<tc>, window_params = [{transform_indices = @transform_0, window_bounds = array<i64: 16, 1>}, {pipeline_mode = #tpu.pipeline_mode<synchronous>, transform_indices = @transform_1, window_bounds = array<i64: 16, 32>}, {transform_indices = @transform_2, window_bounds = array<i64: 16, 32>}]} {
    %c0 = arith.constant 0 : index
    %c0_0 = arith.constant 0 : index
    %0 = vector.load %arg1[%c0, %c0_0] : memref<16x1xi32, #tpu.memory_space<vmem>>, vector<16x1xi32>
    %1 = tpu.iota {dimensions = array<i32: 1>} : vector<16x16xi32>
    %2 = vector.broadcast %0 : vector<16x1xi32> to vector<16x16xi32>
    %3 = arith.cmpi eq, %1, %2 : vector<16x16xi32>
    %4 = arith.extui %3 : vector<16x16xi1> to vector<16x16xi32>
    %5 = arith.sitofp %4 : vector<16x16xi32> to vector<16x16xf32>
    %c0_1 = arith.constant 0 : index
    %c0_2 = arith.constant 0 : index
    %6 = vector.load %arg2[%c0_1, %c0_2] : memref<16x32xf32, #tpu.memory_space<vmem>>, vector<16x32xf32>
    %cst = arith.constant dense<0.000000e+00> : vector<16x32xf32>
    %7 = tpu.matmul %5, %6, %cst {dimension_numbers = #tpu.dot_dimension_numbers<[1], [0], [0], [1], [0, 0, 1, 1], [], []>} : vector<16x16xf32>, vector<16x32xf32>, vector<16x32xf32> -> vector<16x32xf32>
    %c0_3 = arith.constant 0 : index
    %c0_4 = arith.constant 0 : index
    %8 = vector.load %arg3[%c0_3, %c0_4] : memref<16x32xf32, #tpu.memory_space<vmem>>, vector<16x32xf32>
    tpu.vector_store %arg3[%c0_3, %c0_4], %7 {strides = array<i32>} : memref<16x32xf32, #tpu.memory_space<vmem>>, vector<16x32xf32>,
    return
  }
  func.func @transform_0(%arg0: i32) -> (i32, i32) {
    %c0_i32 = arith.constant 0 : i32
    %c0_i32_0 = arith.constant 0 : i32
    return %arg0, %c0_i32 : i32, i32
  }
  func.func @transform_1(%arg0: i32) -> (i32, i32) {
    %c0_i32 = arith.constant 0 : i32
    %c0_i32_0 = arith.constant 0 : i32
    %c0_i32_1 = arith.constant 0 : i32
    return %c0_i32, %c0_i32_0 : i32, i32
  }
  func.func @transform_2(%arg0: i32) -> (i32, i32) {
    %c0_i32 = arith.constant 0 : i32
    %c0_i32_0 = arith.constant 0 : i32
    return %arg0, %c0_i32 : i32, i32
  }
}

</mosaic_0001>

<llo_original>
// kernel: tpu_custom_call.1
$region0: #{tpu_custom_call.1}
  #allocation0 [shape = 'u32[]', space=smem, size = 0x4, offset = 0x4, fixed_abs, tag = 'smem constant byte address 0x4 - core index']
  #allocation1 [shape = 'u32[144,128]{1,0:T(1,128)}', space=vmem, size = 0x12000, scoped, tag = 'internal scratch']
  %s0 = inlined_call_operand.vmem [shape: s32[16,1], index: 0, kind: input, shape index: {}]
  %s1 = inlined_call_operand.vmem [shape: f32[16,32], index: 1, kind: input, shape index: {}]
  %s2 = inlined_call_operand.hbm [shape: f32[16,32], index: 2, kind: output, shape index: {}]
  %s3 = sld [smem:[#allocation0]]
  $region18: #{tpu_custom_call.1} parent=0
    _
  %s5 = ssub.s32 1, %s3
  %s6 = scalar_select 0, %s5, %s3
  $region1: #{tpu_custom_call.1} parent=0
    #allocation2 [shape = 'u8[8192]{0}', space=vmem, size = 0x2000, scoped, tag = 'output window, operand 0, single buffered']
    #allocation3 [shape = 's32[1]{0}', space=sflag, size = 0x4, scoped, tag = 'scoped memory for tpu_custom_call.1']
    %7 = vsyncpa [#allocation3], 0
    // Predicated region
    $region2: #{tpu_custom_call.1} parent=1 // pred_check
      _
    $region3: #{tpu_custom_call.1} parent=1 // pred_check_branch
      %9 = sbr.rel (0) target = $region5
    $region4: #{tpu_custom_call.1} parent=1 // pred_region
      _
    $region5: #{tpu_custom_call.1} parent=1 // pred_fallthru
      _
    // Predicated region
    $region6: #{tpu_custom_call.1} parent=1 // pred_check
      _
    $region7: #{tpu_custom_call.1} parent=1 // pred_check_branch
      %11 = sbr.rel (0) target = $region9
    $region8: #{tpu_custom_call.1} parent=1 // pred_region
      _
    $region9: #{tpu_custom_call.1} parent=1 // pred_fallthru
      _
    %v12 = vld [vmem:[%s0] sm:$0xff]
    %v13 = vld [vmem:[%s0 + $0x8] sm:$0xff]
    %v14 = vlaneseq
    %v15 = vand.u32 %v14, 127
    %16 = vset.pattern.permute.xlu0 0
    %17 = vperm.xlu0 %16, %v12
    %v18 = vpop.permute.xlu0 %17
    %19 = vset.pattern.permute.xlu0 0
    %20 = vperm.xlu0 %19, %v13
    %v21 = vpop.permute.xlu0 %20
    %vm22 = vcmp.eq.s32.totalorder %v15, %v18
    %vm23 = vcmp.eq.s32.totalorder %v15, %v21
    %v24 = vsel %vm22, 1, 0
    %v25 = vsel %vm23, 1, 0
    %v26 = vcvt.s32.f32 %v24
    %v27 = vcvt.s32.f32 %v25
    %v28 = vld [vmem:[%s1] sm:$0xff]
    %v29 = vld [vmem:[%s1 + $0x8] sm:$0xff]
    %vm30 = vcmask 130048
    %v32 = vsel %vm30, %v26, 0
    %v35 = vsel %vm30, %v27, 0
    %37 = vmatprep.subr.mxu0 0.0
    %38 = vmatpush1.msra.mxu0 %v28
    %39 = vmatprep.subr.mxu0 0.0
    %40 = vmatpush1.msra.mxu0 %v29
    %41 = vmatprep.subr.mxu0 0.0
    %42 = vmatpush1.msra.mxu0 0.0
    %43 = vmatprep.subr.mxu0 0.0
    %44 = vmatpush1.msra.mxu0 0.0
    %45 = vmatprep.subr.mxu0 0.0
    %46 = vmatpush1.msra.mxu0 0.0
    %47 = vmatprep.subr.mxu0 0.0
    %48 = vmatpush1.msra.mxu0 0.0
    %49 = vmatprep.subr.mxu0 0.0
    %50 = vmatpush1.msra.mxu0 0.0
    %51 = vmatprep.subr.mxu0 0.0
    %52 = vmatpush1.msra.mxu0 0.0
    %53 = vmatprep.subr.mxu0 0.0
    %54 = vmatpush1.msra.mxu0 0.0
    %55 = vmatprep.subr.mxu0 0.0
    %56 = vmatpush1.msra.mxu0 0.0
    %57 = vmatprep.subr.mxu0 0.0
    %58 = vmatpush1.msra.mxu0 0.0
    %59 = vmatprep.subr.mxu0 0.0
    %60 = vmatpush1.msra.mxu0 0.0
    %61 = vmatprep.subr.mxu0 0.0
    %62 = vmatpush1.msra.mxu0 0.0
    %63 = vmatprep.subr.mxu0 0.0
    %64 = vmatpush1.msra.mxu0 0.0
    %65 = vmatprep.subr.mxu0 0.0
    %66 = vmatpush1.msra.mxu0 0.0
    %67 = vmatprep.subr.mxu0 0.0
    %68 = vmatpush1.msra.mxu0 0.0
    %69 = vmatprep.subr.mxu0 0.0
    %70 = vmatpush1.msra.mxu0 0.0
    %71 = vmatprep.subr.mxu0 0.0
    %72 = vmatpush1.msra.mxu0 0.0
    %73 = vmatprep.subr.mxu0 0.0
    %74 = vmatpush1.msra.mxu0 0.0
    %75 = vmatprep.subr.mxu0 0.0
    %76 = vmatpush1.msra.mxu0 0.0
    %77 = vmatprep.subr.mxu0 0.0
    %78 = vmatpush1.msra.mxu0 0.0
    %79 = vmatprep.subr.mxu0 0.0
    %80 = vmatpush1.msra.mxu0 0.0
    %81 = vmatprep.subr.mxu0 0.0
    %82 = vmatpush1.msra.mxu0 0.0
    %83 = vmatprep.subr.mxu0 0.0
    %84 = vmatpush1.msra.mxu0 0.0
    %85 = vmatprep.subr.mxu0 0.0
    %86 = vmatpush1.msra.mxu0 0.0
    %87 = vmatprep.subr.mxu0 0.0
    %88 = vmatpush1.msra.mxu0 0.0
    %89 = vmatprep.subr.mxu0 0.0
    %90 = vmatpush1.msra.mxu0 0.0
    %91 = vmatprep.subr.mxu0 0.0
    %92 = vmatpush1.msra.mxu0 0.0
    %93 = vmatprep.subr.mxu0 0.0
    %94 = vmatpush1.msra.mxu0 0.0
    %95 = vmatprep.subr.mxu0 0.0
    %96 = vmatpush1.msra.mxu0 0.0
    %97 = vmatprep.subr.mxu0 0.0
    %98 = vmatpush1.msra.mxu0 0.0
    %99 = vmatprep.subr.mxu0 0.0
    %100 = vmatpush1.msra.mxu0 0.0
    %101 = vmatprep.mubr.f32.mxu0 0.0
    %102 = vmatmul.mubr.f32.gmra.mrb[0].mxu0 %v32
    %v103 = vpop.f32.mrb[0].mxu0
    %v104 = vadd.f32 0.0, %v103
    %v105 = vpop.f32.mrb[0].mxu0
    %106 = vmatprep.mubr.f32.mxu0 0.0
    %107 = vmatmul.mubr.f32.gmra.mrb[0].mxu0 %v35
    %v108 = vpop.f32.mrb[0].mxu0
    %v109 = vadd.f32 0.0, %v108
    %v110 = vpop.f32.mrb[0].mxu0
    %111 = vdwg.mxu0
    %vm112 = vcmask 261120
    %113 = vst.msk [vmem:[#allocation2] sm:$0xff] %vm112, %v104
    %114 = vst.msk [vmem:[#allocation2 + $0x8] sm:$0xff] %vm112, %v109
    // Predicated region
    $region10: #{tpu_custom_call.1} parent=1 // pred_check
      _
    $region11: #{tpu_custom_call.1} parent=1 // pred_check_branch
      %116 = sbr.rel (0) target = $region13
    $region12: #{tpu_custom_call.1} parent=1 // pred_region
      %s118 = ssub.s32 256, 256
      %119 = vsyncadd [#allocation3], %s118
      %s120 = sshll.u32 [#allocation2], 4
      %s121 = int_to_ptr.vmem [resolvable:$true] %s120
      %126 = dma.vmem_to_hbm [thread:$0]  %s121, 256, %s2, [#allocation3], 128, 128, 8
    $region13: #{tpu_custom_call.1} parent=1 // pred_fallthru
      _
    // Predicated region
    $region14: #{tpu_custom_call.1} parent=1 // pred_check
      _
    $region15: #{tpu_custom_call.1} parent=1 // pred_check_branch
      %128 = sbr.rel (0) target = $region17
    $region16: #{tpu_custom_call.1} parent=1 // pred_region
      %129 = dma.done [#allocation3], 256
    $region17: #{tpu_custom_call.1} parent=1 // pred_fallthru
      _
    %130 = vsyncpa [#allocation3], 1

// kernel: tpu_custom_call.1
$region0: #{tpu_custom_call.1}
  #allocation0 [shape = 'u32[]', space=smem, size = 0x4, offset = 0x4, fixed_abs, tag = 'smem constant byte address 0x4 - core index']
  #allocation1 [shape = 'u32[144,128]{1,0:T(1,128)}', space=vmem, size = 0x12000, scoped, tag = 'internal scratch']
  %s0 = inlined_call_operand.vmem [shape: s32[16,1], index: 0, kind: input, shape index: {}]
  %s1 = inlined_call_operand.vmem [shape: f32[16,32], index: 1, kind: input, shape index: {}]
  %s2 = inlined_call_operand.hbm [shape: f32[16,32], index: 2, kind: output, shape index: {}]
  %s3 = sld [smem:[#allocation0]]
  $region18: #{tpu_custom_call.1} parent=0
    _
  %s5 = ssub.s32 1, %s3
  %s6 = scalar_select 0, %s5, %s3
  $region1: #{tpu_custom_call.1} parent=0
    #allocation2 [shape = 'u8[8192]{0}', space=vmem, size = 0x2000, scoped, tag = 'output window, operand 0, single buffered']
    #allocation3 [shape = 's32[1]{0}', space=sflag, size = 0x4, scoped, tag = 'scoped memory for tpu_custom_call.1']
    %7 = vsyncpa [#allocation3], 0
    // Predicated region
    $region2: #{tpu_custom_call.1} parent=1 // pred_check
      _
    $region3: #{tpu_custom_call.1} parent=1 // pred_check_branch
      %9 = sbr.rel (0) target = $region5
    $region4: #{tpu_custom_call.1} parent=1 // pred_region
      _
    $region5: #{tpu_custom_call.1} parent=1 // pred_fallthru
      _
    // Predicated region
    $region6: #{tpu_custom_call.1} parent=1 // pred_check
      _
    $region7: #{tpu_custom_call.1} parent=1 // pred_check_branch
      %11 = sbr.rel (0) target = $region9
    $region8: #{tpu_custom_call.1} parent=1 // pred_region
      _
    $region9: #{tpu_custom_call.1} parent=1 // pred_fallthru
      _
    %v12 = vld [vmem:[%s0] sm:$0xff]
    %v13 = vld [vmem:[%s0 + $0x8] sm:$0xff]
    %v14 = vlaneseq
    %v15 = vand.u32 %v14, 127
    %16 = vset.pattern.permute.xlu0 0
    %17 = vperm.xlu0 %16, %v12
    %v18 = vpop.permute.xlu0 %17
    %19 = vset.pattern.permute.xlu0 0
    %20 = vperm.xlu0 %19, %v13
    %v21 = vpop.permute.xlu0 %20
    %vm22 = vcmp.eq.s32.totalorder %v15, %v18
    %vm23 = vcmp.eq.s32.totalorder %v15, %v21
    %v24 = vsel %vm22, 1, 0
    %v25 = vsel %vm23, 1, 0
    %v26 = vcvt.s32.f32 %v24
    %v27 = vcvt.s32.f32 %v25
    %v28 = vld [vmem:[%s1] sm:$0xff]
    %v29 = vld [vmem:[%s1 + $0x8] sm:$0xff]
    %vm30 = vcmask 130048
    %v32 = vsel %vm30, %v26, 0
    %v35 = vsel %vm30, %v27, 0
    %37 = vmatprep.subr.mxu0 0.0
    %38 = vmatpush1.msra.mxu0 %v28
    %39 = vmatprep.subr.mxu0 0.0
    %40 = vmatpush1.msra.mxu0 %v29
    %41 = vmatprep.subr.mxu0 0.0
    %42 = vmatpush1.msra.mxu0 0.0
    %43 = vmatprep.subr.mxu0 0.0
    %44 = vmatpush1.msra.mxu0 0.0
    %45 = vmatprep.subr.mxu0 0.0
    %46 = vmatpush1.msra.mxu0 0.0
    %47 = vmatprep.subr.mxu0 0.0
    %48 = vmatpush1.msra.mxu0 0.0
    %49 = vmatprep.subr.mxu0 0.0
    %50 = vmatpush1.msra.mxu0 0.0
    %51 = vmatprep.subr.mxu0 0.0
    %52 = vmatpush1.msra.mxu0 0.0
    %53 = vmatprep.subr.mxu0 0.0
    %54 = vmatpush1.msra.mxu0 0.0
    %55 = vmatprep.subr.mxu0 0.0
    %56 = vmatpush1.msra.mxu0 0.0
    %57 = vmatprep.subr.mxu0 0.0
    %58 = vmatpush1.msra.mxu0 0.0
    %59 = vmatprep.subr.mxu0 0.0
    %60 = vmatpush1.msra.mxu0 0.0
    %61 = vmatprep.subr.mxu0 0.0
    %62 = vmatpush1.msra.mxu0 0.0
    %63 = vmatprep.subr.mxu0 0.0
    %64 = vmatpush1.msra.mxu0 0.0
    %65 = vmatprep.subr.mxu0 0.0
    %66 = vmatpush1.msra.mxu0 0.0
    %67 = vmatprep.subr.mxu0 0.0
    %68 = vmatpush1.msra.mxu0 0.0
    %69 = vmatprep.subr.mxu0 0.0
    %70 = vmatpush1.msra.mxu0 0.0
    %71 = vmatprep.subr.mxu0 0.0
    %72 = vmatpush1.msra.mxu0 0.0
    %73 = vmatprep.subr.mxu0 0.0
    %74 = vmatpush1.msra.mxu0 0.0
    %75 = vmatprep.subr.mxu0 0.0
    %76 = vmatpush1.msra.mxu0 0.0
    %77 = vmatprep.subr.mxu0 0.0
    %78 = vmatpush1.msra.mxu0 0.0
    %79 = vmatprep.subr.mxu0 0.0
    %80 = vmatpush1.msra.mxu0 0.0
    %81 = vmatprep.subr.mxu0 0.0
    %82 = vmatpush1.msra.mxu0 0.0
    %83 = vmatprep.subr.mxu0 0.0
    %84 = vmatpush1.msra.mxu0 0.0
    %85 = vmatprep.subr.mxu0 0.0
    %86 = vmatpush1.msra.mxu0 0.0
    %87 = vmatprep.subr.mxu0 0.0
    %88 = vmatpush1.msra.mxu0 0.0
    %89 = vmatprep.subr.mxu0 0.0
    %90 = vmatpush1.msra.mxu0 0.0
    %91 = vmatprep.subr.mxu0 0.0
    %92 = vmatpush1.msra.mxu0 0.0
    %93 = vmatprep.subr.mxu0 0.0
    %94 = vmatpush1.msra.mxu0 0.0
    %95 = vmatprep.subr.mxu0 0.0
    %96 = vmatpush1.msra.mxu0 0.0
    %97 = vmatprep.subr.mxu0 0.0
    %98 = vmatpush1.msra.mxu0 0.0
    %99 = vmatprep.subr.mxu0 0.0
    %100 = vmatpush1.msra.mxu0 0.0
    %101 = vmatprep.mubr.f32.mxu0 0.0
    %102 = vmatmul.mubr.f32.gmra.mrb[0].mxu0 %v32
    %v103 = vpop.f32.mrb[0].mxu0
    %v104 = vadd.f32 0.0, %v103
    %v105 = vpop.f32.mrb[0].mxu0
    %106 = vmatprep.mubr.f32.mxu0 0.0
    %107 = vmatmul.mubr.f32.gmra.mrb[0].mxu0 %v35
    %v108 = vpop.f32.mrb[0].mxu0
    %v109 = vadd.f32 0.0, %v108
    %v110 = vpop.f32.mrb[0].mxu0
    %111 = vdwg.mxu0
    %vm112 = vcmask 261120
    %113 = vst.msk [vmem:[#allocation2] sm:$0xff] %vm112, %v104
    %114 = vst.msk [vmem:[#allocation2 + $0x8] sm:$0xff] %vm112, %v109
    // Predicated region
    $region10: #{tpu_custom_call.1} parent=1 // pred_check
      _
    $region11: #{tpu_custom_call.1} parent=1 // pred_check_branch
      %116 = sbr.rel (0) target = $region13
    $region12: #{tpu_custom_call.1} parent=1 // pred_region
      %s118 = ssub.s32 256, 256
      %119 = vsyncadd [#allocation3], %s118
      %s120 = sshll.u32 [#allocation2], 4
      %s121 = int_to_ptr.vmem [resolvable:$true] %s120
      %126 = dma.vmem_to_hbm [thread:$0]  %s121, 256, %s2, [#allocation3], 128, 128, 8
    $region13: #{tpu_custom_call.1} parent=1 // pred_fallthru
      _
    // Predicated region
    $region14: #{tpu_custom_call.1} parent=1 // pred_check
      _
    $region15: #{tpu_custom_call.1} parent=1 // pred_check_branch
      %128 = sbr.rel (0) target = $region17
    $region16: #{tpu_custom_call.1} parent=1 // pred_region
      %129 = dma.done [#allocation3], 256
    $region17: #{tpu_custom_call.1} parent=1 // pred_fallthru
      _
    %130 = vsyncpa [#allocation3], 1

</llo_original>
